<compile_context>
chip_gen: v5e
topology: v5e:2x2
jax: 0.10.0
libtpu: 0.0.40
codegen_flags: <defaults>
</compile_context>

<pallas_src>
import functools

import jax
import jax.numpy as jnp
from jax import lax
from jax.experimental import pallas as pl
from jax.experimental.pallas import tpu as pltpu


# -----------------------------------------------------------------------------
# Fused kernel: cv1 (1xk along W) -> cv2 (kx1 along H), folded-BN bias + SiLU
# -----------------------------------------------------------------------------
def _cross_conv_kernel(x_ref, w1_ref, b1_ref, w2_ref, b2_ref, m1_ref, m2_ref,
                       o_ref, xcol_ref, ycol_ref, *, k, p, width, add):
    # x_ref   : (1, C1, H*W)   one image, channels on sublanes, H*W on lanes
    # w1_ref  : (C_, k*C1)     cv1 taps, BN1 scale folded, col index = dw*C1+c1
    # b1_ref  : (C_, 1)        cv1 folded BN bias (f32)
    # w2_ref  : (C2, k*C_)     cv2 taps, BN2 scale folded, col index = dh*C_+c_
    # b2_ref  : (C2, 1)        cv2 folded BN bias (f32)
    # m1_ref  : (k, H*W)       per-tap W-boundary validity mask (0/1)
    # m2_ref  : (k, H*W)       per-tap H-boundary validity mask (0/1)
    # o_ref   : (1, C2, H*W)
    # xcol_ref: VMEM (k*C1, H*W) stage-1 im2col slab (never leaves the chip)
    # ycol_ref: VMEM (k*C_, H*W) stage-2 im2col slab (intermediate never in HBM)
    cdt = x_ref.dtype
    hw = x_ref.shape[2]
    c1 = x_ref.shape[1]
    c_ = w1_ref.shape[0]

    x2d = x_ref[0]                                       # (C1, HW)

    # ---- stage 1 im2col: k shifted taps along W, boundary-masked ----------
    # roll is an XLU op and the mask multiply a VPU op, both off the MXU slot.
    for dw in range(k):
        if dw == p:                                      # centre tap: no shift
            xcol_ref[dw * c1:(dw + 1) * c1, :] = x2d
        else:
            shifted = pltpu.roll(x2d, (p - dw) % hw, axis=1)
            xcol_ref[dw * c1:(dw + 1) * c1, :] = shifted * m1_ref[dw:dw + 1, :]

    # ---- cv1: ONE (C_, k*C1) x (k*C1, HW) MXU contraction, f32 accumulate --
    y = jnp.dot(w1_ref[...], xcol_ref[...], preferred_element_type=jnp.float32)
    y = y + b1_ref[...]                                  # folded BN bias
    y = y * jax.nn.sigmoid(y)                            # SiLU (f32: v5e-safe)
    y = y.astype(cdt)                                    # back to compute dtype

    # ---- stage 2 im2col: k shifted taps along H = shifts of width lanes ----
    for dh in range(k):
        if dh == p:
            ycol_ref[dh * c_:(dh + 1) * c_, :] = y
        else:
            shifted = pltpu.roll(y, ((p - dh) * width) % hw, axis=1)
            ycol_ref[dh * c_:(dh + 1) * c_, :] = shifted * m2_ref[dh:dh + 1, :]

    # ---- cv2: ONE (C2, k*C_) x (k*C_, HW) MXU contraction -------------------
    z = jnp.dot(w2_ref[...], ycol_ref[...], preferred_element_type=jnp.float32)
    z = z + b2_ref[...]
    z = z * jax.nn.sigmoid(z)                            # SiLU
    if add:                                              # residual shortcut
        z = z + x2d.astype(jnp.float32)
    o_ref[0] = z.astype(o_ref.dtype)                     # lane-dense store


# -----------------------------------------------------------------------------
# Host-side parameter prep (BN folding, weight re-layout, boundary masks)
# -----------------------------------------------------------------------------
def _prep_weights(params, k, compute_dtype, eps=1e-5):
    w1 = params["w1_oihw"]                               # (C_, C1, 1, k)
    w2 = params["w2_oihw"]                               # (C2, C_, k, 1)
    s1 = params["g1"] / jnp.sqrt(params["v1"] + eps)
    s2 = params["g2"] / jnp.sqrt(params["v2"] + eps)
    c_, c1 = w1.shape[0], w1.shape[1]
    c2 = w2.shape[0]
    w1_mat = (w1[:, :, 0, :] * s1[:, None, None])        # (C_, C1, k)
    w1_mat = jnp.transpose(w1_mat, (0, 2, 1)).reshape(c_, k * c1)
    w2_mat = (w2[:, :, :, 0] * s2[:, None, None])        # (C2, C_, k)
    w2_mat = jnp.transpose(w2_mat, (0, 2, 1)).reshape(c2, k * c_)
    b1 = (params["b1"] - params["m1"] * s1)[:, None].astype(jnp.float32)
    b2 = (params["b2"] - params["m2"] * s2)[:, None].astype(jnp.float32)
    return (w1_mat.astype(compute_dtype), b1,
            w2_mat.astype(compute_dtype), b2)


def _boundary_masks(H, W, k, p, dtype):
    """Per-tap 0/1 masks over flat H*W positions for the zero-padding halo."""
    offs = jnp.arange(k) - p                                            # (k,)
    wpos = jnp.arange(W)[None, :] + offs[:, None]                       # (k, W)
    m1 = ((wpos >= 0) & (wpos < W)).astype(dtype)
    m1 = jnp.tile(m1, (1, H))                     # flat j: depends on j % W
    hpos = jnp.arange(H)[None, :] + offs[:, None]                       # (k, H)
    m2 = ((hpos >= 0) & (hpos < H)).astype(dtype)
    m2 = jnp.repeat(m2, W, axis=1)                # flat j: depends on j // W
    return m1, m2


def _vmem_budget_bytes(c1, c_, c2, hw, k, in_dt, out_dt, cmp_dt):
    ib = jnp.dtype(in_dt).itemsize
    ob = jnp.dtype(out_dt).itemsize
    cb = jnp.dtype(cmp_dt).itemsize
    blocks = 2 * c1 * hw * ib + 2 * c2 * hw * ob          # double-buffered I/O
    consts = (c_ * k * c1 + c2 * k * c_ + 2 * k * hw) * cb + (c_ + c2) * 4
    scratch = (k * c1 + k * c_) * hw * cb                 # im2col slabs
    temps = (c1 + c_ + c2) * hw * 4                       # f32 y/z/shift temps
    return blocks + consts + scratch + temps


def _vmem_limit_bytes(needed):
    # v7x has only 64 MiB of physical VMEM per TensorCore (the smallest across
    # v5e/v6e/v7x) — stay safely under it instead of trusting 3/4 of the
    # reported chip capacity.
    if needed > (48 << 20):
        raise NotImplementedError(
            "feature map too large for a single-step VMEM slab; "
            "TODO(synk): add an H-tiled grid axis with a (k-1)-row halo")
    return max(32 << 20, min(2 * needed + (4 << 20), 56 << 20))


def cross_conv_forward(x_nchw, params, *, k=3, s=1, shortcut=False,
                       compute_dtype=jnp.float32):
    """CrossConv.forward: cv2(cv1(x)) (+ x if shortcut and c1 == c2)."""
    N, C1, H, W = x_nchw.shape
    p = k // 2
    assert k % 2 == 1, "even k changes the output size; unsupported"
    assert s == 1, "strided CrossConv unsupported in the flat-lane kernel"

    w1_mat, b1c, w2_mat, b2c = _prep_weights(params, k, compute_dtype)
    C_, C2 = w1_mat.shape[0], w2_mat.shape[0]
    HW = H * W
    add = bool(shortcut) and (C1 == C2)

    m1, m2 = _boundary_masks(H, W, k, p, compute_dtype)

    # Free row-major reshape (no transpose, no extra HBM pass).
    x_flat = x_nchw.astype(compute_dtype).reshape(N, C1, HW)

    needed = _vmem_budget_bytes(C1, C_, C2, HW, k,
                                x_flat.dtype, x_nchw.dtype, compute_dtype)

    out_flat = pl.pallas_call(
        functools.partial(_cross_conv_kernel, k=k, p=p, width=W, add=add),
        out_shape=jax.ShapeDtypeStruct((N, C2, HW), x_nchw.dtype),
        grid_spec=pltpu.PrefetchScalarGridSpec(
            num_scalar_prefetch=0,
            grid=(N,),                                   # one image per step
            in_specs=[
                pl.BlockSpec((1, C1, HW), lambda n: (n, 0, 0)),
                # weights / biases / masks: constant index_map -> stay resident
                pl.BlockSpec((C_, k * C1), lambda n: (0, 0)),
                pl.BlockSpec((C_, 1), lambda n: (0, 0)),
                pl.BlockSpec((C2, k * C_), lambda n: (0, 0)),
                pl.BlockSpec((C2, 1), lambda n: (0, 0)),
                pl.BlockSpec((k, HW), lambda n: (0, 0)),
                pl.BlockSpec((k, HW), lambda n: (0, 0)),
            ],
            out_specs=pl.BlockSpec((1, C2, HW), lambda n: (n, 0, 0)),
            scratch_shapes=[
                pltpu.VMEM((k * C1, HW), compute_dtype),   # stage-1 im2col
                pltpu.VMEM((k * C_, HW), compute_dtype),   # stage-2 im2col
            ],
        ),
        compiler_params=pltpu.CompilerParams(
            dimension_semantics=("parallel",),           # megacore over batch
            vmem_limit_bytes=_vmem_limit_bytes(needed),
        ),
    )(x_flat, w1_mat, b1c, w2_mat, b2c, m1, m2)

    return out_flat.reshape(N, C2, H, W)                 # free reshape


# -----------------------------------------------------------------------------
# Pure-JAX reference (lax.conv) for verification
# -----------------------------------------------------------------------------
def _conv_bn_silu_ref(x, w_oihw, gamma, beta, mean, var, strides, padding):
    y = lax.conv_general_dilated(
        x, w_oihw, window_strides=strides, padding=padding,
        dimension_numbers=("NCHW", "OIHW", "NCHW"))
    scale = gamma / jnp.sqrt(var + 1e-5)
    bias = beta - mean * scale
    y = y * scale[None, :, None, None] + bias[None, :, None, None]
    return y * jax.nn.sigmoid(y)


def cross_conv_ref(x, params, *, k=3, s=1, shortcut=False):
    p = k // 2
    y = _conv_bn_silu_ref(x, params["w1_oihw"], params["g1"], params["b1"],
                          params["m1"], params["v1"],
                          strides=(1, s), padding=((0, 0), (p, p)))
    z = _conv_bn_silu_ref(y, params["w2_oihw"], params["g2"], params["b2"],
                          params["m2"], params["v2"],
                          strides=(s, 1), padding=((p, p), (0, 0)))
    if shortcut and x.shape[1] == z.shape[1]:
        z = x + z
    return z


# -----------------------------------------------------------------------------
if __name__ == "__main__":
    key = jax.random.PRNGKey(0)
    N, C1, H, W = 2, 4, 16, 16
    C2, K, S, E = 4, 3, 1, 1.0
    C_ = int(C2 * E)

    keys = jax.random.split(key, 11)
    x = jax.random.normal(keys[0], (N, C1, H, W), jnp.float32)

    # Conv weights in PyTorch OIHW layout (Conv uses bias=False).
    w1_oihw = 0.1 * jax.random.normal(keys[1], (C_, C1, 1, K), jnp.float32)
    w2_oihw = 0.1 * jax.random.normal(keys[2], (C2, C_, K, 1), jnp.float32)
    # BatchNorm eval-mode parameters / running stats, deterministic.
    g1 = 1.0 + 0.1 * jax.random.normal(keys[3], (C_,), jnp.float32)
    b1 = 0.1 * jax.random.normal(keys[4], (C_,), jnp.float32)
    m1 = 0.1 * jax.random.normal(keys[5], (C_,), jnp.float32)
    v1 = 1.0 + 0.1 * jax.random.uniform(keys[6], (C_,), jnp.float32)
    g2 = 1.0 + 0.1 * jax.random.normal(keys[7], (C2,), jnp.float32)
    b2 = 0.1 * jax.random.normal(keys[8], (C2,), jnp.float32)
    m2 = 0.1 * jax.random.normal(keys[9], (C2,), jnp.float32)
    v2 = 1.0 + 0.1 * jax.random.uniform(keys[10], (C2,), jnp.float32)

    params = dict(w1_oihw=w1_oihw, w2_oihw=w2_oihw,
                  g1=g1, b1=b1, m1=m1, v1=v1,
                  g2=g2, b2=b2, m2=m2, v2=v2)

    # f32 compute path, tight tolerance (CrossConv default shortcut=False).
    for shortcut in (False, True):
        out = cross_conv_forward(x, params, k=K, s=S, shortcut=shortcut)
        out = jax.block_until_ready(out)
        ref = jax.block_until_ready(
            cross_conv_ref(x, params, k=K, s=S, shortcut=shortcut))
        assert out.shape == (N, C2, H, W), out.shape
        assert jnp.allclose(out, ref, rtol=1e-4, atol=1e-4), \
            float(jnp.max(jnp.abs(out - ref)))

    # bf16 compute path (halves HBM traffic / VMEM on v6e/v7x); loose check.
    out_bf16 = cross_conv_forward(x, params, k=K, s=S, shortcut=False,
                                  compute_dtype=jnp.bfloat16)
    out_bf16 = jax.block_until_ready(out_bf16).astype(jnp.float32)
    ref = cross_conv_ref(x, params, k=K, s=S, shortcut=False)
    assert jnp.allclose(out_bf16, ref, rtol=5e-2, atol=5e-2), \
        float(jnp.max(jnp.abs(out_bf16 - ref)))

    print("KERNEL_OK")
</pallas_src>

<mosaic_0001>
module attributes {stable_mosaic.version = 11 : i64} {
  func.func @_cross_conv_kernel(%arg0: i32, %arg1: memref<1x4x256xf32, #tpu.memory_space<vmem>>, %arg2: memref<4x12xf32, #tpu.memory_space<vmem>>, %arg3: memref<4x1xf32, #tpu.memory_space<vmem>>, %arg4: memref<4x12xf32, #tpu.memory_space<vmem>>, %arg5: memref<4x1xf32, #tpu.memory_space<vmem>>, %arg6: memref<3x256xf32, #tpu.memory_space<vmem>>, %arg7: memref<3x256xf32, #tpu.memory_space<vmem>>, %arg8: memref<1x4x256xf32, #tpu.memory_space<vmem>>, %arg9: memref<12x256xf32, #tpu.memory_space<vmem>>, %arg10: memref<12x256xf32, #tpu.memory_space<vmem>>) attributes {dimension_semantics = [#tpu.dimension_semantics<parallel>], iteration_bounds = array<i64: 2>, scalar_prefetch = 0 : i64, scratch_operands = 2 : i64, tpu.core_type = #tpu.core_type<tc>, window_params = [{transform_indices = @transform_0, window_bounds = array<i64: 1, 4, 256>}, {pipeline_mode = #tpu.pipeline_mode<synchronous>, transform_indices = @transform_1, window_bounds = array<i64: 4, 12>}, {pipeline_mode = #tpu.pipeline_mode<synchronous>, transform_indices = @transform_2, window_bounds = array<i64: 4, 1>}, {pipeline_mode = #tpu.pipeline_mode<synchronous>, transform_indices = @transform_3, window_bounds = array<i64: 4, 12>}, {pipeline_mode = #tpu.pipeline_mode<synchronous>, transform_indices = @transform_4, window_bounds = array<i64: 4, 1>}, {pipeline_mode = #tpu.pipeline_mode<synchronous>, transform_indices = @transform_5, window_bounds = array<i64: 3, 256>}, {pipeline_mode = #tpu.pipeline_mode<synchronous>, transform_indices = @transform_6, window_bounds = array<i64: 3, 256>}, {transform_indices = @transform_7, window_bounds = array<i64: 1, 4, 256>}]} {
    %c0 = arith.constant 0 : index
    %c0_0 = arith.constant 0 : index
    %c0_1 = arith.constant 0 : index
    %0 = vector.load %arg1[%c0, %c0_0, %c0_1] : memref<1x4x256xf32, #tpu.memory_space<vmem>>, vector<1x4x256xf32>
    %1 = vector.shape_cast %0 : vector<1x4x256xf32> to vector<4x256xf32>
    %c1_i32 = arith.constant 1 : i32
    %2 = tpu.dynamic_rotate %1 by %c1_i32 dim 1 : vector<4x256xf32>, i32 -> vector<4x256xf32>
    %c0_2 = arith.constant 0 : index
    %c0_3 = arith.constant 0 : index
    %3 = vector.load %arg6[%c0_2, %c0_3] : memref<3x256xf32, #tpu.memory_space<vmem>>, vector<1x256xf32>
    %4 = vector.broadcast %3 : vector<1x256xf32> to vector<4x256xf32>
    %5 = arith.mulf %2, %4 : vector<4x256xf32>
    %c0_4 = arith.constant 0 : index
    %c0_5 = arith.constant 0 : index
    %6 = vector.load %arg9[%c0_4, %c0_5] : memref<12x256xf32, #tpu.memory_space<vmem>>, vector<4x256xf32>
    tpu.vector_store %arg9[%c0_4, %c0_5], %5 {strides = array<i32>} : memref<12x256xf32, #tpu.memory_space<vmem>>, vector<4x256xf32>,
    %c4 = arith.constant 4 : index
    %c0_6 = arith.constant 0 : index
    %7 = vector.load %arg9[%c4, %c0_6] : memref<12x256xf32, #tpu.memory_space<vmem>>, vector<4x256xf32>
    tpu.vector_store %arg9[%c4, %c0_6], %1 {strides = array<i32>} : memref<12x256xf32, #tpu.memory_space<vmem>>, vector<4x256xf32>,
    %c255_i32 = arith.constant 255 : i32
    %8 = tpu.dynamic_rotate %1 by %c255_i32 dim 1 : vector<4x256xf32>, i32 -> vector<4x256xf32>
    %c2 = arith.constant 2 : index
    %c0_7 = arith.constant 0 : index
    %9 = vector.load %arg6[%c2, %c0_7] : memref<3x256xf32, #tpu.memory_space<vmem>>, vector<1x256xf32>
    %10 = vector.broadcast %9 : vector<1x256xf32> to vector<4x256xf32>
    %11 = arith.mulf %8, %10 : vector<4x256xf32>
    %c8 = arith.constant 8 : index
    %c0_8 = arith.constant 0 : index
    %12 = vector.load %arg9[%c8, %c0_8] : memref<12x256xf32, #tpu.memory_space<vmem>>, vector<4x256xf32>
    tpu.vector_store %arg9[%c8, %c0_8], %11 {strides = array<i32>} : memref<12x256xf32, #tpu.memory_space<vmem>>, vector<4x256xf32>,
    %c0_9 = arith.constant 0 : index
    %c0_10 = arith.constant 0 : index
    %13 = vector.load %arg2[%c0_9, %c0_10] : memref<4x12xf32, #tpu.memory_space<vmem>>, vector<4x12xf32>
    %c0_11 = arith.constant 0 : index
    %c0_12 = arith.constant 0 : index
    %14 = vector.load %arg9[%c0_11, %c0_12] : memref<12x256xf32, #tpu.memory_space<vmem>>, vector<12x256xf32>
    %cst = arith.constant dense<0.000000e+00> : vector<4x256xf32>
    %15 = tpu.matmul %13, %14, %cst {dimension_numbers = #tpu.dot_dimension_numbers<[1], [0], [0], [1], [0, 0, 1, 1], [], []>} : vector<4x12xf32>, vector<12x256xf32>, vector<4x256xf32> -> vector<4x256xf32>
    %c0_13 = arith.constant 0 : index
    %c0_14 = arith.constant 0 : index
    %16 = vector.load %arg3[%c0_13, %c0_14] : memref<4x1xf32, #tpu.memory_space<vmem>>, vector<4x1xf32>
    %17 = vector.broadcast %16 : vector<4x1xf32> to vector<4x256xf32>
    %18 = arith.addf %15, %17 : vector<4x256xf32>
    %19 = arith.negf %18 : vector<4x256xf32>
    %20 = math.exp %19 : vector<4x256xf32>
    %cst_15 = arith.constant 1.000000e+00 : f32
    %21 = vector.broadcast %cst_15 : f32 to vector<4x256xf32>
    %22 = arith.addf %21, %20 : vector<4x256xf32>
    %23 = arith.divf %21, %22 : vector<4x256xf32>
    %24 = arith.mulf %18, %23 : vector<4x256xf32>
    %c16_i32 = arith.constant 16 : i32
    %25 = tpu.dynamic_rotate %24 by %c16_i32 dim 1 : vector<4x256xf32>, i32 -> vector<4x256xf32>
    %c0_16 = arith.constant 0 : index
    %c0_17 = arith.constant 0 : index
    %26 = vector.load %arg7[%c0_16, %c0_17] : memref<3x256xf32, #tpu.memory_space<vmem>>, vector<1x256xf32>
    %27 = vector.broadcast %26 : vector<1x256xf32> to vector<4x256xf32>
    %28 = arith.mulf %25, %27 : vector<4x256xf32>
    %c0_18 = arith.constant 0 : index
    %c0_19 = arith.constant 0 : index
    %29 = vector.load %arg10[%c0_18, %c0_19] : memref<12x256xf32, #tpu.memory_space<vmem>>, vector<4x256xf32>
    tpu.vector_store %arg10[%c0_18, %c0_19], %28 {strides = array<i32>} : memref<12x256xf32, #tpu.memory_space<vmem>>, vector<4x256xf32>,
    %c4_20 = arith.constant 4 : index
    %c0_21 = arith.constant 0 : index
    %30 = vector.load %arg10[%c4_20, %c0_21] : memref<12x256xf32, #tpu.memory_space<vmem>>, vector<4x256xf32>
    tpu.vector_store %arg10[%c4_20, %c0_21], %24 {strides = array<i32>} : memref<12x256xf32, #tpu.memory_space<vmem>>, vector<4x256xf32>,
    %c240_i32 = arith.constant 240 : i32
    %31 = tpu.dynamic_rotate %24 by %c240_i32 dim 1 : vector<4x256xf32>, i32 -> vector<4x256xf32>
    %c2_22 = arith.constant 2 : index
    %c0_23 = arith.constant 0 : index
    %32 = vector.load %arg7[%c2_22, %c0_23] : memref<3x256xf32, #tpu.memory_space<vmem>>, vector<1x256xf32>
    %33 = vector.broadcast %32 : vector<1x256xf32> to vector<4x256xf32>
    %34 = arith.mulf %31, %33 : vector<4x256xf32>
    %c8_24 = arith.constant 8 : index
    %c0_25 = arith.constant 0 : index
    %35 = vector.load %arg10[%c8_24, %c0_25] : memref<12x256xf32, #tpu.memory_space<vmem>>, vector<4x256xf32>
    tpu.vector_store %arg10[%c8_24, %c0_25], %34 {strides = array<i32>} : memref<12x256xf32, #tpu.memory_space<vmem>>, vector<4x256xf32>,
    %c0_26 = arith.constant 0 : index
    %c0_27 = arith.constant 0 : index
    %36 = vector.load %arg4[%c0_26, %c0_27] : memref<4x12xf32, #tpu.memory_space<vmem>>, vector<4x12xf32>
    %c0_28 = arith.constant 0 : index
    %c0_29 = arith.constant 0 : index
    %37 = vector.load %arg10[%c0_28, %c0_29] : memref<12x256xf32, #tpu.memory_space<vmem>>, vector<12x256xf32>
    %cst_30 = arith.constant dense<0.000000e+00> : vector<4x256xf32>
    %38 = tpu.matmul %36, %37, %cst_30 {dimension_numbers = #tpu.dot_dimension_numbers<[1], [0], [0], [1], [0, 0, 1, 1], [], []>} : vector<4x12xf32>, vector<12x256xf32>, vector<4x256xf32> -> vector<4x256xf32>
    %c0_31 = arith.constant 0 : index
    %c0_32 = arith.constant 0 : index
    %39 = vector.load %arg5[%c0_31, %c0_32] : memref<4x1xf32, #tpu.memory_space<vmem>>, vector<4x1xf32>
    %40 = vector.broadcast %39 : vector<4x1xf32> to vector<4x256xf32>
    %41 = arith.addf %38, %40 : vector<4x256xf32>
    %42 = arith.negf %41 : vector<4x256xf32>
    %43 = math.exp %42 : vector<4x256xf32>
    %cst_33 = arith.constant 1.000000e+00 : f32
    %44 = vector.broadcast %cst_33 : f32 to vector<4x256xf32>
    %45 = arith.addf %44, %43 : vector<4x256xf32>
    %46 = arith.divf %44, %45 : vector<4x256xf32>
    %47 = arith.mulf %41, %46 : vector<4x256xf32>
    %c0_34 = arith.constant 0 : index
    %c0_35 = arith.constant 0 : index
    %c0_36 = arith.constant 0 : index
    %48 = vector.load %arg8[%c0_34, %c0_35, %c0_36] : memref<1x4x256xf32, #tpu.memory_space<vmem>>, vector<1x4x256xf32>
    %49 = vector.shape_cast %48 : vector<1x4x256xf32> to vector<4x256xf32>
    %50 = vector.shape_cast %47 : vector<4x256xf32> to vector<1x4x256xf32>
    tpu.vector_store %arg8[%c0_34, %c0_35, %c0_36], %50 {strides = array<i32>} : memref<1x4x256xf32, #tpu.memory_space<vmem>>, vector<1x4x256xf32>,
    return
  }
  func.func @transform_0(%arg0: i32) -> (i32, i32, i32) {
    %c0_i32 = arith.constant 0 : i32
    %c0_i32_0 = arith.constant 0 : i32
    %c0_i32_1 = arith.constant 0 : i32
    return %arg0, %c0_i32, %c0_i32_0 : i32, i32, i32
  }
  func.func @transform_1(%arg0: i32) -> (i32, i32) {
    %c0_i32 = arith.constant 0 : i32
    %c0_i32_0 = arith.constant 0 : i32
    %c0_i32_1 = arith.constant 0 : i32
    return %c0_i32, %c0_i32_0 : i32, i32
  }
  func.func @transform_2(%arg0: i32) -> (i32, i32) {
    %c0_i32 = arith.constant 0 : i32
    %c0_i32_0 = arith.constant 0 : i32
    %c0_i32_1 = arith.constant 0 : i32
    return %c0_i32, %c0_i32_0 : i32, i32
  }
  func.func @transform_3(%arg0: i32) -> (i32, i32) {
    %c0_i32 = arith.constant 0 : i32
    %c0_i32_0 = arith.constant 0 : i32
    %c0_i32_1 = arith.constant 0 : i32
    return %c0_i32, %c0_i32_0 : i32, i32
  }
  func.func @transform_4(%arg0: i32) -> (i32, i32) {
    %c0_i32 = arith.constant 0 : i32
    %c0_i32_0 = arith.constant 0 : i32
    %c0_i32_1 = arith.constant 0 : i32
    return %c0_i32, %c0_i32_0 : i32, i32
  }
  func.func @transform_5(%arg0: i32) -> (i32, i32) {
    %c0_i32 = arith.constant 0 : i32
    %c0_i32_0 = arith.constant 0 : i32
    %c0_i32_1 = arith.constant 0 : i32
    return %c0_i32, %c0_i32_0 : i32, i32
  }
  func.func @transform_6(%arg0: i32) -> (i32, i32) {
    %c0_i32 = arith.constant 0 : i32
    %c0_i32_0 = arith.constant 0 : i32
    %c0_i32_1 = arith.constant 0 : i32
    return %c0_i32, %c0_i32_0 : i32, i32
  }
  func.func @transform_7(%arg0: i32) -> (i32, i32, i32) {
    %c0_i32 = arith.constant 0 : i32
    %c0_i32_0 = arith.constant 0 : i32
    %c0_i32_1 = arith.constant 0 : i32
    return %arg0, %c0_i32, %c0_i32_0 : i32, i32, i32
  }
}

</mosaic_0001>

<llo_original>
// kernel: tpu_custom_call.1
$region0: #{tpu_custom_call.1}
  #allocation0 [shape = 'u32[]', space=smem, size = 0x4, offset = 0x4, fixed_abs, tag = 'smem constant byte address 0x4 - core index']
  #allocation1 [shape = 'u32[72,128]{1,0:T(1,128)}', space=vmem, size = 0x9000, scoped, tag = 'internal scratch']
  #allocation2 [shape = 'f32[12,256]{1,0:T(8,128)}', space=vmem, size = 0x4000, scoped, tag = 'scratch operand']
  #allocation3 [shape = 'f32[12,256]{1,0:T(8,128)}', space=vmem, size = 0x4000, scoped, tag = 'scratch operand']
  %s0 = inlined_call_operand.hbm [shape: f32[2,4,256], index: 0, kind: input, shape index: {}]
  %s1 = inlined_call_operand.hbm [shape: f32[4,12], index: 1, kind: input, shape index: {}]
  %s2 = inlined_call_operand.vmem [shape: f32[4,1], index: 2, kind: input, shape index: {}]
  %s3 = inlined_call_operand.hbm [shape: f32[4,12], index: 3, kind: input, shape index: {}]
  %s4 = inlined_call_operand.vmem [shape: f32[4,1], index: 4, kind: input, shape index: {}]
  %s5 = inlined_call_operand.vmem [shape: f32[3,256], index: 5, kind: input, shape index: {}]
  %s6 = inlined_call_operand.hbm [shape: f32[3,256], index: 6, kind: input, shape index: {}]
  %s7 = inlined_call_operand.hbm [shape: f32[2,4,256], index: 7, kind: output, shape index: {}]
  %s8 = sld [smem:[#allocation0]]
  $region77: #{tpu_custom_call.1} parent=0
    _
  %s10 = ssub.s32 1, %s8
  %s11 = scalar_select 0, %s10, %s8
  $region1: #{tpu_custom_call.1} parent=0
    #allocation4 [shape = 'u8[8192]{0}', space=vmem, size = 0x2000, scoped, tag = 'input window, operand 0']
    #allocation5 [shape = 's32[2]{0}', space=sflag, size = 0x8, scoped, tag = 'scoped memory for tpu_custom_call.1']
    #allocation6 [shape = 's32[2]{0}', space=sflag, size = 0x8, scoped, tag = 'scoped memory for tpu_custom_call.1']
    #allocation7 [shape = 'u8[2048]{0}', space=vmem, size = 0x800, scoped, tag = 'input window, operand 1, single buffered']
    #allocation8 [shape = 's32[1]{0}', space=sflag, size = 0x4, scoped, tag = 'scoped memory for tpu_custom_call.1']
    #allocation9 [shape = 'u8[2048]{0}', space=vmem, size = 0x800, scoped, tag = 'input window, operand 3, single buffered']
    #allocation10 [shape = 'u8[4096]{0}', space=vmem, size = 0x1000, scoped, tag = 'input window, operand 6, single buffered']
    #allocation11 [shape = 's32[1]{0}', space=sflag, size = 0x4, scoped, tag = 'scoped memory for tpu_custom_call.1']
    #allocation12 [shape = 'u8[8192]{0}', space=vmem, size = 0x2000, scoped, tag = 'output window, operand 0']
    %12 = vsyncpa [#allocation5], 0
    %s13 = scalar_lea.sflag [#allocation5], 1
    %14 = vsyncpa %s13, 0
    %15 = vsyncpa [#allocation8], 0
    %16 = vsyncpa [#allocation11], 0
    %17 = vsyncpa [#allocation6], 0
    %s18 = scalar_lea.sflag [#allocation6], 1
    %19 = vsyncpa %s18, 0
    loop: start=0, step=1, limit=4
    $region2: #{tpu_custom_call.1} parent=1 // loop_pre_header
      _
    $region3: #{tpu_custom_call.1} parent=1 // loop_header
      %s21 = sphi 0, %s25
      %p22 = scmp.ge.s32.totalorder %s21, 4
      %s31 = sphi 0, %s33
      %s34 = sphi 0, %s31
      %s35 = sphi 0, %s34
      %s51 = sphi 0, %s35
      %s55 = sphi 0, %s55
      %s57 = sphi 0, %s55
      %s58 = sphi 0, %s57
      %s72 = sphi 0, %s58
      %s76 = sphi 0, %s76
      %s78 = sphi 0, %s76
      %s79 = sphi 0, %s78
      %s93 = sphi 0, %s79
      %s97 = sphi 0, %s97
      %s99 = sphi 0, %s97
      %s100 = sphi 0, %s99
      %s114 = sphi 0, %s100
      %s118 = sphi 0, %s118
      %s120 = sphi 0, %s118
      %s121 = sphi 0, %s120
      %s135 = sphi 0, %s121
      %s139 = sphi 0, %s139
      %s141 = sphi 0, %s139
      %s142 = sphi 0, %s141
      %s156 = sphi 0, %s142
      %s160 = sphi 0, %s160
      %s162 = sphi 0, %s160
      %s163 = sphi 0, %s162
      %s177 = sphi 0, %s163
      %s183 = sphi 0, %s185
      %s186 = sphi 0, %s183
      %s187 = sphi 0, %s186
      %s203 = sphi 0, %s187
    $region4: #{tpu_custom_call.1} parent=1 // loop_header_branch
      %24 = sbr.rel (%p22) target = $region8
    $region5: #{tpu_custom_call.1} parent=1 // loop_body
      %s26 = ssub.s32 %s21, 1
      %s27 = ssub.s32 %s21, 2
      %s28 = sadd.s32 %s21, 1
      %s29 = ssub.s32 %s21, %s28
      %p30 = scmp.eq.s32.totalorder %s29, 0
      %s32 = sadd.s32 %s31, 1
      %s33 = scalar_select %p30, %s31, %s32
      %p36 = pneg %p30
      %p37 = scmp.eq.s32.totalorder %s21, 1
      %p38 = por %p36, %p37
      %p39 = scmp.ne.s32.totalorder %s31, %s34
      %p40 = scmp.eq.s32.totalorder %s21, 0
      %p41 = por %p39, %p40
      %p42 = scmp.ne.s32.totalorder %s31, %s34
      %p43 = scmp.eq.s32.totalorder %s26, 1
      %p44 = por %p42, %p43
      %p45 = scmp.ne.s32.totalorder %s34, %s35
      %p46 = scmp.eq.s32.totalorder %s26, 0
      %p47 = por %p45, %p46
      %p48 = scmp.ne.s32.totalorder %s34, %s35
      %p49 = scmp.eq.s32.totalorder %s27, 1
      %p50 = por %p48, %p49
      %p52 = scmp.ne.s32.totalorder %s35, %s51
      %p53 = scmp.eq.s32.totalorder %s27, 0
      %p54 = por %p52, %p53
      %s56 = sadd.s32 %s55, 1
      %p59 = scmp.eq.s32.totalorder %s21, 1
      %p60 = scmp.ne.s32.totalorder %s55, %s57
      %p61 = scmp.eq.s32.totalorder %s21, 0
      %p62 = por %p60, %p61
      %p63 = scmp.ne.s32.totalorder %s55, %s57
      %p64 = scmp.eq.s32.totalorder %s26, 1
      %p65 = por %p63, %p64
      %p66 = scmp.ne.s32.totalorder %s57, %s58
      %p67 = scmp.eq.s32.totalorder %s26, 0
      %p68 = por %p66, %p67
      %p69 = scmp.ne.s32.totalorder %s57, %s58
      %p70 = scmp.eq.s32.totalorder %s27, 1
      %p71 = por %p69, %p70
      %p73 = scmp.ne.s32.totalorder %s58, %s72
      %p74 = scmp.eq.s32.totalorder %s27, 0
      %p75 = por %p73, %p74
      %s77 = sadd.s32 %s76, 1
      %p80 = scmp.eq.s32.totalorder %s21, 1
      %p81 = scmp.ne.s32.totalorder %s76, %s78
      %p82 = scmp.eq.s32.totalorder %s21, 0
      %p83 = por %p81, %p82
      %p84 = scmp.ne.s32.totalorder %s76, %s78
      %p85 = scmp.eq.s32.totalorder %s26, 1
      %p86 = por %p84, %p85
      %p87 = scmp.ne.s32.totalorder %s78, %s79
      %p88 = scmp.eq.s32.totalorder %s26, 0
      %p89 = por %p87, %p88
      %p90 = scmp.ne.s32.totalorder %s78, %s79
      %p91 = scmp.eq.s32.totalorder %s27, 1
      %p92 = por %p90, %p91
      %p94 = scmp.ne.s32.totalorder %s79, %s93
      %p95 = scmp.eq.s32.totalorder %s27, 0
      %p96 = por %p94, %p95
      %s98 = sadd.s32 %s97, 1
      %p101 = scmp.eq.s32.totalorder %s21, 1
      %p102 = scmp.ne.s32.totalorder %s97, %s99
      %p103 = scmp.eq.s32.totalorder %s21, 0
      %p104 = por %p102, %p103
      %p105 = scmp.ne.s32.totalorder %s97, %s99
      %p106 = scmp.eq.s32.totalorder %s26, 1
      %p107 = por %p105, %p106
      %p108 = scmp.ne.s32.totalorder %s99, %s100
      %p109 = scmp.eq.s32.totalorder %s26, 0
      %p110 = por %p108, %p109
      %p111 = scmp.ne.s32.totalorder %s99, %s100
      %p112 = scmp.eq.s32.totalorder %s27, 1
      %p113 = por %p111, %p112
      %p115 = scmp.ne.s32.totalorder %s100, %s114
      %p116 = scmp.eq.s32.totalorder %s27, 0
      %p117 = por %p115, %p116
      %s119 = sadd.s32 %s118, 1
      %p122 = scmp.eq.s32.totalorder %s21, 1
      %p123 = scmp.ne.s32.totalorder %s118, %s120
      %p124 = scmp.eq.s32.totalorder %s21, 0
      %p125 = por %p123, %p124
      %p126 = scmp.ne.s32.totalorder %s118, %s120
      %p127 = scmp.eq.s32.totalorder %s26, 1
      %p128 = por %p126, %p127
      %p129 = scmp.ne.s32.totalorder %s120, %s121
      %p130 = scmp.eq.s32.totalorder %s26, 0
      %p131 = por %p129, %p130
      %p132 = scmp.ne.s32.totalorder %s120, %s121
      %p133 = scmp.eq.s32.totalorder %s27, 1
      %p134 = por %p132, %p133
      %p136 = scmp.ne.s32.totalorder %s121, %s135
      %p137 = scmp.eq.s32.totalorder %s27, 0
      %p138 = por %p136, %p137
      %s140 = sadd.s32 %s139, 1
      %p143 = scmp.eq.s32.totalorder %s21, 1
      %p144 = scmp.ne.s32.totalorder %s139, %s141
      %p145 = scmp.eq.s32.totalorder %s21, 0
      %p146 = por %p144, %p145
      %p147 = scmp.ne.s32.totalorder %s139, %s141
      %p148 = scmp.eq.s32.totalorder %s26, 1
      %p149 = por %p147, %p148
      %p150 = scmp.ne.s32.totalorder %s141, %s142
      %p151 = scmp.eq.s32.totalorder %s26, 0
      %p152 = por %p150, %p151
      %p153 = scmp.ne.s32.totalorder %s141, %s142
      %p154 = scmp.eq.s32.totalorder %s27, 1
      %p155 = por %p153, %p154
      %p157 = scmp.ne.s32.totalorder %s142, %s156
      %p158 = scmp.eq.s32.totalorder %s27, 0
      %p159 = por %p157, %p158
      %s161 = sadd.s32 %s160, 1
      %p164 = scmp.eq.s32.totalorder %s21, 1
      %p165 = scmp.ne.s32.totalorder %s160, %s162
      %p166 = scmp.eq.s32.totalorder %s21, 0
      %p167 = por %p165, %p166
      %p168 = scmp.ne.s32.totalorder %s160, %s162
      %p169 = scmp.eq.s32.totalorder %s26, 1
      %p170 = por %p168, %p169
      %p171 = scmp.ne.s32.totalorder %s162, %s163
      %p172 = scmp.eq.s32.totalorder %s26, 0
      %p173 = por %p171, %p172
      %p174 = scmp.ne.s32.totalorder %s162, %s163
      %p175 = scmp.eq.s32.totalorder %s27, 1
      %p176 = por %p174, %p175
      %p178 = scmp.ne.s32.totalorder %s163, %s177
      %p179 = scmp.eq.s32.totalorder %s27, 0
      %p180 = por %p178, %p179
      %s181 = ssub.s32 %s21, %s28
      %p182 = scmp.eq.s32.totalorder %s181, 0
      %s184 = sadd.s32 %s183, 1
      %s185 = scalar_select %p182, %s183, %s184
      %p188 = pneg %p182
      %p189 = scmp.eq.s32.totalorder %s21, 1
      %p190 = por %p188, %p189
      %p191 = scmp.ne.s32.totalorder %s183, %s186
      %p192 = scmp.eq.s32.totalorder %s21, 0
      %p193 = por %p191, %p192
      %p194 = scmp.ne.s32.totalorder %s183, %s186
      %p195 = scmp.eq.s32.totalorder %s26, 1
      %p196 = por %p194, %p195
      %p197 = scmp.ne.s32.totalorder %s186, %s187
      %p198 = scmp.eq.s32.totalorder %s26, 0
      %p199 = por %p197, %p198
      %p200 = scmp.ne.s32.totalorder %s186, %s187
      %p201 = scmp.eq.s32.totalorder %s27, 1
      %p202 = por %p200, %p201
      %p204 = scmp.ne.s32.totalorder %s187, %s203
      %p205 = scmp.eq.s32.totalorder %s27, 0
      %p206 = por %p204, %p205
      %p207 = scmp.le.s32.totalorder 1, %s21
      %p208 = scmp.lt.s32.totalorder %s21, 3
      %p209 = pnand %p207, %p208
      %p210 = pneg %p209
      // Predicated region
      $region9: #{tpu_custom_call.1} parent=5 // pred_check
        _
      $region10: #{tpu_custom_call.1} parent=5 // pred_check_branch
        %212 = sbr.rel (%p209) target = $region12
      $region11: #{tpu_custom_call.1} parent=5 // pred_region
        %s213 = ssub.s32 %s21, 1
        // Predicated region
        $region13: #{tpu_custom_call.1} parent=11 // pred_check
          %p214 = pneg %p68
        $region14: #{tpu_custom_call.1} parent=11 // pred_check_branch
          %216 = sbr.rel (%p214) target = $region16
        $region15: #{tpu_custom_call.1} parent=11 // pred_region
          %218 = vsyncadd [#allocation8], 0
          %s220 = sshll.u32 %s1, 4
          %s221 = int_to_ptr.hbm [resolvable:$true] %s220
          %s222 = sshll.u32 [#allocation7], 4
          %s223 = int_to_ptr.vmem [resolvable:$true] %s222
          %225 = dma.hbm_to_vmem [thread:$0]  %s221, 64, %s223, [#allocation8]
        $region16: #{tpu_custom_call.1} parent=11 // pred_fallthru
          _
        // Predicated region
        $region17: #{tpu_custom_call.1} parent=11 // pred_check
          %p226 = pneg %p89
        $region18: #{tpu_custom_call.1} parent=11 // pred_check_branch
          %228 = sbr.rel (%p226) target = $region20
        $region19: #{tpu_custom_call.1} parent=11 // pred_region
          _
        $region20: #{tpu_custom_call.1} parent=11 // pred_fallthru
          _
        // Predicated region
        $region21: #{tpu_custom_call.1} parent=11 // pred_check
          %p229 = pneg %p110
        $region22: #{tpu_custom_call.1} parent=11 // pred_check_branch
          %231 = sbr.rel (%p229) target = $region24
        $region23: #{tpu_custom_call.1} parent=11 // pred_region
          %233 = vsyncadd [#allocation8], 0
          %s235 = sshll.u32 %s3, 4
          %s236 = int_to_ptr.hbm [resolvable:$true] %s235
          %s237 = sshll.u32 [#allocation9], 4
          %s238 = int_to_ptr.vmem [resolvable:$true] %s237
          %240 = dma.hbm_to_vmem [thread:$0]  %s236, 64, %s238, [#allocation8]
        $region24: #{tpu_custom_call.1} parent=11 // pred_fallthru
          _
        // Predicated region
        $region25: #{tpu_custom_call.1} parent=11 // pred_check
          %p241 = pneg %p131
        $region26: #{tpu_custom_call.1} parent=11 // pred_check_branch
          %243 = sbr.rel (%p241) target = $region28
        $region27: #{tpu_custom_call.1} parent=11 // pred_region
          _
        $region28: #{tpu_custom_call.1} parent=11 // pred_fallthru
          _
        // Predicated region
        $region29: #{tpu_custom_call.1} parent=11 // pred_check
          %p244 = pneg %p152
        $region30: #{tpu_custom_call.1} parent=11 // pred_check_branch
          %246 = sbr.rel (%p244) target = $region32
        $region31: #{tpu_custom_call.1} parent=11 // pred_region
          _
        $region32: #{tpu_custom_call.1} parent=11 // pred_fallthru
          _
        // Predicated region
        $region33: #{tpu_custom_call.1} parent=11 // pred_check
          %p247 = pneg %p173
        $region34: #{tpu_custom_call.1} parent=11 // pred_check_branch
          %249 = sbr.rel (%p247) target = $region36
        $region35: #{tpu_custom_call.1} parent=11 // pred_region
          %251 = vsyncadd [#allocation11], 0
          %s253 = sshll.u32 %s6, 4
          %s254 = int_to_ptr.hbm [resolvable:$true] %s253
          %s255 = sshll.u32 [#allocation10], 4
          %s256 = int_to_ptr.vmem [resolvable:$true] %s255
          %258 = dma.hbm_to_vmem [thread:$0]  %s254, 128, %s256, [#allocation11]
        $region36: #{tpu_custom_call.1} parent=11 // pred_fallthru
          _
      $region12: #{tpu_custom_call.1} parent=5 // pred_fallthru
        _
      %p259 = scmp.lt.s32.totalorder %s21, 2
      // Predicated region
      $region37: #{tpu_custom_call.1} parent=5 // pred_check
        %p260 = pneg %p259
      $region38: #{tpu_custom_call.1} parent=5 // pred_check_branch
        %262 = sbr.rel (%p260) target = $region40
      $region39: #{tpu_custom_call.1} parent=5 // pred_region
        // Predicated region
        $region41: #{tpu_custom_call.1} parent=39 // pred_check
          %p263 = pneg %p41
        $region42: #{tpu_custom_call.1} parent=39 // pred_check_branch
          %265 = sbr.rel (%p263) target = $region44
        $region43: #{tpu_custom_call.1} parent=39 // pred_region
          %s266 = sand.u32 %s31, 1
          %s267 = scalar_lea.sflag [#allocation5], %s266
          %s268 = sand.u32 %s31, 1
          %s269 = smul.addr %s268, 8
          %s270 = scalar_lea.vmem [#allocation4], %s269
          %272 = vsyncadd %s267, 0
          %s273 = smul.addr %s21, 2
          %s274 = smul.addr %s273, 4
          %s275 = scalar_lea.hbm %s0, %s274
          %s277 = sshll.u32 %s275, 4
          %s278 = int_to_ptr.hbm [resolvable:$true] %s277
          %s279 = sshll.u32 %s270, 4
          %s280 = int_to_ptr.vmem [resolvable:$true] %s279
          %282 = dma.hbm_to_vmem [thread:$0]  %s278, 128, %s280, %s267
        $region44: #{tpu_custom_call.1} parent=39 // pred_fallthru
          _
      $region40: #{tpu_custom_call.1} parent=5 // pred_fallthru
        _
      %p283 = scmp.le.s32.totalorder 1, %s21
      %p284 = scmp.lt.s32.totalorder %s21, 3
      %p285 = pnand %p283, %p284
      %p286 = pneg %p285
      // Predicated region
      $region45: #{tpu_custom_call.1} parent=5 // pred_check
        _
      $region46: #{tpu_custom_call.1} parent=5 // pred_check_branch
        %288 = sbr.rel (%p285) target = $region48
      $region47: #{tpu_custom_call.1} parent=5 // pred_region
        %s289 = ssub.s32 %s21, 1
        %s290 = sand.u32 %s34, 1
        %s291 = scalar_lea.sflag [#allocation5], %s290
        %s292 = sand.u32 %s34, 1
        %s293 = smul.addr %s292, 8
        %s294 = scalar_lea.vmem [#allocation4], %s293
        // Predicated region
        $region49: #{tpu_custom_call.1} parent=47 // pred_check
          %p295 = pneg %p47
        $region50: #{tpu_custom_call.1} parent=47 // pred_check_branch
          %297 = sbr.rel (%p295) target = $region52
        $region51: #{tpu_custom_call.1} parent=47 // pred_region
          %299 = dma.done %s291, 128
        $region52: #{tpu_custom_call.1} parent=47 // pred_fallthru
          _
        // Predicated region
        $region53: #{tpu_custom_call.1} parent=47 // pred_check
          %p300 = pneg %p68
        $region54: #{tpu_custom_call.1} parent=47 // pred_check_branch
          %302 = sbr.rel (%p300) target = $region56
        $region55: #{tpu_custom_call.1} parent=47 // pred_region
          %304 = dma.done [#allocation8], 64
        $region56: #{tpu_custom_call.1} parent=47 // pred_fallthru
          _
        // Predicated region
        $region57: #{tpu_custom_call.1} parent=47 // pred_check
          %p305 = pneg %p110
        $region58: #{tpu_custom_call.1} parent=47 // pred_check_branch
          %307 = sbr.rel (%p305) target = $region60
        $region59: #{tpu_custom_call.1} parent=47 // pred_region
          %309 = dma.done [#allocation8], 64
        $region60: #{tpu_custom_call.1} parent=47 // pred_fallthru
          _
        // Predicated region
        $region61: #{tpu_custom_call.1} parent=47 // pred_check
          %p310 = pneg %p173
        $region62: #{tpu_custom_call.1} parent=47 // pred_check_branch
          %312 = sbr.rel (%p310) target = $region64
        $region63: #{tpu_custom_call.1} parent=47 // pred_region
          %314 = dma.done [#allocation11], 128
        $region64: #{tpu_custom_call.1} parent=47 // pred_fallthru
          _
        %s315 = sand.u32 %s34, 1
        %s316 = scalar_lea.sflag [#allocation5], %s315
        %s317 = sand.u32 %s34, 1
        %s318 = smul.addr %s317, 8
        %s319 = scalar_lea.vmem [#allocation4], %s318
        %p320 = pneg %p47
        %p321 = pneg %p44
        %p322 = pneg %p68
        %p323 = pneg %p65
        %p324 = pneg %p89
        %p325 = pneg %p86
        %p326 = pneg %p110
        %p327 = pneg %p107
        %p328 = pneg %p131
        %p329 = pneg %p128
        %p330 = pneg %p152
        %p331 = pneg %p149
        %p332 = pneg %p173
        %p333 = pneg %p170
        %p334 = pneg %p199
        %p335 = pneg %p196
        %s336 = sand.u32 %s186, 1
        %s337 = scalar_lea.sflag [#allocation6], %s336
        %s338 = sand.u32 %s186, 1
        %s339 = smul.addr %s338, 8
        %s340 = scalar_lea.vmem [#allocation12], %s339
        %v341 = vld [vmem:[%s294] sm:$0xff]
        %343 = vst [vmem:[#allocation1] ss:$2 sm:$0xff] %v341
        %v344 = vld.sshfl [vmem:[#allocation1] sm:$0xff pattern:$0x75316420]
        %v345 = vld.sshfl [vmem:[#allocation1 + $0x8] sm:$0xff pattern:$0x75316420]
        %348 = vrot.lane.b32.xlu0 %v344, 1
        %v349 = vpop.permute.xlu0 %348
        %350 = vrot.lane.b32.xlu0 %v345, 1
        %v351 = vpop.permute.xlu0 %350
        %v352 = vlaneseq
        %v353 = vand.u32 %v352, 127
        %vm354 = vcmp.lt.s32.totalorder %v353, 1
        %v355 = vsel %vm354, %v349, %v351
        %v356 = vsel %vm354, %v351, %v349
        %v357 = vld [vmem:[%s5] ss:$4 sm:$0x3]
        %v359 = vperm.slane %v357, 0
        %v360 = vperm.slane %v357, 1
        %v363 = vmul.f32 %v356, %v359
        %v364 = vmul.f32 %v355, %v360
        %365 = vst [vmem:[#allocation2] sm:$0xf] %v363
        %366 = vst [vmem:[#allocation2 + $0x8] sm:$0xf] %v364
        %s367 = scalar_lea.vmem [#allocation1], 1
        %368 = vst [vmem:[%s367] ss:$2 sm:$0xff] %v341
        %v369 = vld.sshfl [vmem:[#allocation1] sm:$0xff pattern:$0x75316420]
        %v370 = vld.sshfl [vmem:[#allocation1 + $0x8] sm:$0xff pattern:$0x75316420]
        %373 = vst [vmem:[#allocation2] sm:$0xf0] %v369
        %374 = vst [vmem:[#allocation2 + $0x8] sm:$0xf0] %v370
        %375 = vst [vmem:[#allocation1] ss:$2 sm:$0xff] %v341
        %v376 = vld.sshfl [vmem:[#allocation1] sm:$0xff pattern:$0x75316420]
        %v377 = vld.sshfl [vmem:[#allocation1 + $0x8] sm:$0xff pattern:$0x75316420]
        %380 = vrot.lane.b32.xlu0 %v376, 127
        %v381 = vpop.permute.xlu0 %380
        %382 = vrot.lane.b32.xlu0 %v377, 127
        %v383 = vpop.permute.xlu0 %382
        %vm384 = vcmp.lt.s32.totalorder %v353, 127
        %v385 = vsel %vm384, %v381, %v383
        %v386 = vsel %vm384, %v383, %v381
        %s387 = scalar_lea.vmem %s5, 2
        %v388 = vld [vmem:[%s387] ss:$4 sm:$0x3]
        %v390 = vperm.slane %v388, 0
        %v391 = vperm.slane %v388, 1
        %v394 = vmul.f32 %v385, %v390
        %v395 = vmul.f32 %v386, %v391
        %396 = vst [vmem:[#allocation2 + $0x10] sm:$0xf] %v394
        %397 = vst [vmem:[#allocation2 + $0x18] sm:$0xf] %v395
        %v398 = vld [vmem:[#allocation7] sm:$0xf]
        %v399 = vld [vmem:[#allocation2] sm:$0xff]
        %v400 = vld [vmem:[#allocation2 + $0x8] sm:$0xff]
        %v401 = vld [vmem:[#allocation2 + $0x10] sm:$0xf]
        %v402 = vld [vmem:[#allocation2 + $0x18] sm:$0xf]
        %v403 = vld [vmem:[%s2] sm:$0xf]
        %405 = vset.pattern.permute.xlu0 0
        %406 = vperm.xlu0 %405, %v403
        %v407 = vpop.permute.xlu0 %406
        %vm409 = vcmask 97280
        %v411 = vsel %vm409, %v398, 0
        %vm413 = vcmask 1043456
        %v415 = vsel %vm413, %v401, 0
        %v418 = vsel %vm413, %v402, 0
        %420 = vmatpush.msra.mxu0 0.0
        %421 = vmatpush.msra.mxu0 0.0
        %422 = vmatpush.msra.mxu0 0.0
        %423 = vmatpush.msra.mxu0 0.0
        %424 = vmatpush.msra.mxu0 0.0
        %425 = vmatpush.msra.mxu0 0.0
        %426 = vmatpush.msra.mxu0 0.0
        %427 = vmatpush.msra.mxu0 0.0
        %428 = vmatpush.msra.mxu0 0.0
        %429 = vmatpush.msra.mxu0 0.0
        %430 = vmatpush.msra.mxu0 0.0
        %431 = vmatpush.msra.mxu0 0.0
        %432 = vmatpush.msra.mxu0 0.0
        %433 = vmatpush.msra.mxu0 0.0
        %434 = vmatpush.msra.mxu0 %v415
        %435 = vmatpush.msra.mxu0 %v399
        %436 = vmatmul.f32.gmra.mxu0 %v411
        %v437 = vpop.f32.mrf.mxu0
        %v438 = vadd.f32 %v407, %v437
        %439 = vdwg.mxu0
        %440 = vmatpush.msra.mxu0 0.0
        %441 = vmatpush.msra.mxu0 0.0
        %442 = vmatpush.msra.mxu0 0.0
        %443 = vmatpush.msra.mxu0 0.0
        %444 = vmatpush.msra.mxu0 0.0
        %445 = vmatpush.msra.mxu0 0.0
        %446 = vmatpush.msra.mxu0 0.0
        %447 = vmatpush.msra.mxu0 0.0
        %448 = vmatpush.msra.mxu0 0.0
        %449 = vmatpush.msra.mxu0 0.0
        %450 = vmatpush.msra.mxu0 0.0
        %451 = vmatpush.msra.mxu0 0.0
        %452 = vmatpush.msra.mxu0 0.0
        %453 = vmatpush.msra.mxu0 0.0
        %454 = vmatpush.msra.mxu0 %v418
        %455 = vmatpush.msra.mxu0 %v400
        %456 = vmatmul.f32.gmra.mxu0 %v411
        %v457 = vpop.f32.mrf.mxu0
        %v458 = vadd.f32 %v407, %v457
        %459 = vdwg.mxu0
        %v460 = vxor.u32 %v438, 2147483648
        %v461 = vxor.u32 %v458, 2147483648
        %v462 = vmul.f32 %v460, 1.442695
        %v463 = vpow.pop %v462
        %v464 = vmul.f32 %v461, 1.442695
        %v465 = vpow.pop %v464
        %v466 = vadd.f32 %v463, 1.0
        %v467 = vadd.f32 %v465, 1.0
        %v468 = vrcp.pop %v466
        %v469 = vmul.f32 %v466, %v468
        %v470 = vsub.f32 1.0, %v469
        %v471 = vmul.f32 %v468, %v470
        %v472 = vadd.f32 %v468, %v471
        %vm473 = vweird.f32 %v466
        %vm474 = vweird.f32 %v468
        %vm475 = vmor %vm473, %vm474
        %v476 = vsel %vm475, %v468, %v472
        %v477 = vand.u32 2147483647, %v466
        %vm478 = vcmp.eq.f32.partialorder %v477, 8.507059e+37
        %v479 = vand.u32 %v466, 2147483648
        %v480 = vor.u32 1.1754944e-38, %v479
        %v481 = vsel %vm478, %v480, %v476
        %v482 = vmul.f32 1.0, %v481
        %v483 = vrcp.pop %v467
        %v484 = vmul.f32 %v467, %v483
        %v485 = vsub.f32 1.0, %v484
        %v486 = vmul.f32 %v483, %v485
        %v487 = vadd.f32 %v483, %v486
        %vm488 = vweird.f32 %v467
        %vm489 = vweird.f32 %v483
        %vm490 = vmor %vm488, %vm489
        %v491 = vsel %vm490, %v483, %v487
        %v492 = vand.u32 2147483647, %v467
        %vm493 = vcmp.eq.f32.partialorder %v492, 8.507059e+37
        %v494 = vand.u32 %v467, 2147483648
        %v495 = vor.u32 1.1754944e-38, %v494
        %v496 = vsel %vm493, %v495, %v491
        %v497 = vmul.f32 1.0, %v496
        %v498 = vmul.f32 %v438, %v482
        %v499 = vmul.f32 %v458, %v497
        %500 = vrot.lane.b32.xlu0 %v498, 16
        %v501 = vpop.permute.xlu0 %500
        %502 = vrot.lane.b32.xlu0 %v499, 16
        %v503 = vpop.permute.xlu0 %502
        %vm504 = vcmp.lt.s32.totalorder %v353, 16
        %v505 = vsel %vm504, %v501, %v503
        %v506 = vsel %vm504, %v503, %v501
        %v507 = vld [vmem:[#allocation10] ss:$4 sm:$0x3]
        %v509 = vperm.slane %v507, 0
        %v510 = vperm.slane %v507, 1
        %v513 = vmul.f32 %v506, %v509
        %v514 = vmul.f32 %v505, %v510
        %515 = vst [vmem:[#allocation3] sm:$0xf] %v513
        %516 = vst [vmem:[#allocation3 + $0x8] sm:$0xf] %v514
        %v519 = vrot.slane %v498, 4
        %v520 = vrot.slane %v499, 4
        %523 = vst [vmem:[#allocation3] sm:$0xf0] %v519
        %524 = vst [vmem:[#allocation3 + $0x8] sm:$0xf0] %v520
        %525 = vrot.lane.b32.xlu0 %v498, 112
        %v526 = vpop.permute.xlu0 %525
        %527 = vrot.lane.b32.xlu0 %v499, 112
        %v528 = vpop.permute.xlu0 %527
        %vm529 = vcmp.lt.s32.totalorder %v353, 112
        %v530 = vsel %vm529, %v526, %v528
        %v531 = vsel %vm529, %v528, %v526
        %s532 = scalar_lea.vmem [#allocation10], 2
        %v533 = vld [vmem:[%s532] ss:$4 sm:$0x3]
        %v535 = vperm.slane %v533, 0
        %v536 = vperm.slane %v533, 1
        %v539 = vmul.f32 %v530, %v535
        %v540 = vmul.f32 %v531, %v536
        %541 = vst [vmem:[#allocation3 + $0x10] sm:$0xf] %v539
        %542 = vst [vmem:[#allocation3 + $0x18] sm:$0xf] %v540
        %v543 = vld [vmem:[#allocation9] sm:$0xf]
        %v544 = vld [vmem:[#allocation3] sm:$0xff]
        %v545 = vld [vmem:[#allocation3 + $0x8] sm:$0xff]
        %v546 = vld [vmem:[#allocation3 + $0x10] sm:$0xf]
        %v547 = vld [vmem:[#allocation3 + $0x18] sm:$0xf]
        %v548 = vld [vmem:[%s4] sm:$0xf]
        %550 = vset.pattern.permute.xlu0 0
        %551 = vperm.xlu0 %550, %v548
        %v552 = vpop.permute.xlu0 %551
        %v555 = vsel %vm409, %v543, 0
        %v558 = vsel %vm413, %v546, 0
        %v561 = vsel %vm413, %v547, 0
        %563 = vmatpush.msra.mxu0 0.0
        %564 = vmatpush.msra.mxu0 0.0
        %565 = vmatpush.msra.mxu0 0.0
        %566 = vmatpush.msra.mxu0 0.0
        %567 = vmatpush.msra.mxu0 0.0
        %568 = vmatpush.msra.mxu0 0.0
        %569 = vmatpush.msra.mxu0 0.0
        %570 = vmatpush.msra.mxu0 0.0
        %571 = vmatpush.msra.mxu0 0.0
        %572 = vmatpush.msra.mxu0 0.0
        %573 = vmatpush.msra.mxu0 0.0
        %574 = vmatpush.msra.mxu0 0.0
        %575 = vmatpush.msra.mxu0 0.0
        %576 = vmatpush.msra.mxu0 0.0
        %577 = vmatpush.msra.mxu0 %v558
        %578 = vmatpush.msra.mxu0 %v544
        %579 = vmatmul.f32.gmra.mxu0 %v555
        %v580 = vpop.f32.mrf.mxu0
        %v581 = vadd.f32 %v552, %v580
        %582 = vdwg.mxu0
        %583 = vmatpush.msra.mxu0 0.0
        %584 = vmatpush.msra.mxu0 0.0
        %585 = vmatpush.msra.mxu0 0.0
        %586 = vmatpush.msra.mxu0 0.0
        %587 = vmatpush.msra.mxu0 0.0
        %588 = vmatpush.msra.mxu0 0.0
        %589 = vmatpush.msra.mxu0 0.0
        %590 = vmatpush.msra.mxu0 0.0
        %591 = vmatpush.msra.mxu0 0.0
        %592 = vmatpush.msra.mxu0 0.0
        %593 = vmatpush.msra.mxu0 0.0
        %594 = vmatpush.msra.mxu0 0.0
        %595 = vmatpush.msra.mxu0 0.0
        %596 = vmatpush.msra.mxu0 0.0
        %597 = vmatpush.msra.mxu0 %v561
        %598 = vmatpush.msra.mxu0 %v545
        %599 = vmatmul.f32.gmra.mxu0 %v555
        %v600 = vpop.f32.mrf.mxu0
        %v601 = vadd.f32 %v552, %v600
        %602 = vdwg.mxu0
        %v603 = vxor.u32 %v581, 2147483648
        %v604 = vxor.u32 %v601, 2147483648
        %v605 = vmul.f32 %v603, 1.442695
        %v606 = vpow.pop %v605
        %v607 = vmul.f32 %v604, 1.442695
        %v608 = vpow.pop %v607
        %v609 = vadd.f32 %v606, 1.0
        %v610 = vadd.f32 %v608, 1.0
        %v611 = vrcp.pop %v609
        %v612 = vmul.f32 %v609, %v611
        %v613 = vsub.f32 1.0, %v612
        %v614 = vmul.f32 %v611, %v613
        %v615 = vadd.f32 %v611, %v614
        %vm616 = vweird.f32 %v609
        %vm617 = vweird.f32 %v611
        %vm618 = vmor %vm616, %vm617
        %v619 = vsel %vm618, %v611, %v615
        %v620 = vand.u32 2147483647, %v609
        %vm621 = vcmp.eq.f32.partialorder %v620, 8.507059e+37
        %v622 = vand.u32 %v609, 2147483648
        %v623 = vor.u32 1.1754944e-38, %v622
        %v624 = vsel %vm621, %v623, %v619
        %v625 = vmul.f32 1.0, %v624
        %v626 = vrcp.pop %v610
        %v627 = vmul.f32 %v610, %v626
        %v628 = vsub.f32 1.0, %v627
        %v629 = vmul.f32 %v626, %v628
        %v630 = vadd.f32 %v626, %v629
        %vm631 = vweird.f32 %v610
        %vm632 = vweird.f32 %v626
        %vm633 = vmor %vm631, %vm632
        %v634 = vsel %vm633, %v626, %v630
        %v635 = vand.u32 2147483647, %v610
        %vm636 = vcmp.eq.f32.partialorder %v635, 8.507059e+37
        %v637 = vand.u32 %v610, 2147483648
        %v638 = vor.u32 1.1754944e-38, %v637
        %v639 = vsel %vm636, %v638, %v634
        %v640 = vmul.f32 1.0, %v639
        %v641 = vmul.f32 %v581, %v625
        %v642 = vmul.f32 %v601, %v640
        %v645 = vrot.slane %v642, 4
        %v646 = vsel %vm413, %v641, %v645
        %648 = vst [vmem:[%s340] sm:$0xff] %v646
        %s649 = sand.u32 %s186, 1
        %s650 = scalar_lea.sflag [#allocation6], %s649
        %s651 = sand.u32 %s186, 1
        %s652 = smul.addr %s651, 8
        %s653 = scalar_lea.vmem [#allocation12], %s652
        // Predicated region
        $region65: #{tpu_custom_call.1} parent=47 // pred_check
          %p654 = pneg %p196
        $region66: #{tpu_custom_call.1} parent=47 // pred_check_branch
          %656 = sbr.rel (%p654) target = $region68
        $region67: #{tpu_custom_call.1} parent=47 // pred_region
          %658 = vsyncadd %s650, 0
          %s659 = smul.addr %s26, 2
          %s660 = smul.addr %s659, 4
          %s661 = scalar_lea.hbm %s7, %s660
          %s663 = sshll.u32 %s653, 4
          %s664 = int_to_ptr.vmem [resolvable:$true] %s663
          %s665 = sshll.u32 %s661, 4
          %s666 = int_to_ptr.hbm [resolvable:$true] %s665
          %668 = dma.vmem_to_hbm [thread:$0]  %s664, 128, %s666, %s650
        $region68: #{tpu_custom_call.1} parent=47 // pred_fallthru
          _
      $region48: #{tpu_custom_call.1} parent=5 // pred_fallthru
        _
      %p669 = scmp.le.s32.totalorder 2, %s21
      // Predicated region
      $region69: #{tpu_custom_call.1} parent=5 // pred_check
        %p670 = pneg %p669
      $region70: #{tpu_custom_call.1} parent=5 // pred_check_branch
        %672 = sbr.rel (%p670) target = $region72
      $region71: #{tpu_custom_call.1} parent=5 // pred_region
        %s673 = ssub.s32 %s21, 2
        // Predicated region
        $region73: #{tpu_custom_call.1} parent=71 // pred_check
          %p674 = pneg %p202
        $region74: #{tpu_custom_call.1} parent=71 // pred_check_branch
          %676 = sbr.rel (%p674) target = $region76
        $region75: #{tpu_custom_call.1} parent=71 // pred_region
          %s677 = sand.u32 %s187, 1
          %s678 = scalar_lea.sflag [#allocation6], %s677
          %s679 = sand.u32 %s187, 1
          %s680 = smul.addr %s679, 8
          %s681 = scalar_lea.vmem [#allocation12], %s680
          %683 = dma.done %s678, 128
        $region76: #{tpu_custom_call.1} parent=71 // pred_fallthru
          _
      $region72: #{tpu_custom_call.1} parent=5 // pred_fallthru
        _
    $region6: #{tpu_custom_call.1} parent=1 // loop_footer
      %s25 = sadd.s32 1, %s21
    $region7: #{tpu_custom_call.1} parent=1 // loop_footer_branch
      %20 = sbr.rel target = $region3
    $region8: #{tpu_custom_call.1} parent=1 // loop_exit
      _
    %684 = vsyncpa [#allocation5], 1
    %s685 = scalar_lea.sflag [#allocation5], 1
    %686 = vsyncpa %s685, 1
    %687 = vsyncpa [#allocation8], 1
    %688 = vsyncpa [#allocation11], 1
    %689 = vsyncpa [#allocation6], 1
    %s690 = scalar_lea.sflag [#allocation6], 1
    %691 = vsyncpa %s690, 1

</llo_original>
